<compile_context>
chip_gen: v5e
topology: v5e:2x2
jax: 0.10.0
libtpu: 0.0.40
codegen_flags: <defaults>
</compile_context>

<pallas_src>
import functools

import jax
import jax.numpy as jnp
from jax.experimental import pallas as pl
from jax.experimental.pallas import tpu as pltpu


# ------------------------- per-generation VMEM budget ---------------------- #

def _vmem_bytes():
    try:
        info = pltpu.get_tpu_info()
        return int(getattr(info, "vmem_capacity_bytes", 128 << 20))
    except Exception:
        return 128 << 20


_VMEM = _vmem_bytes()
_VMEM_LIMIT = min(int(_VMEM * 0.75), 100 << 20)
# Budget used when deciding whether a full-K (no reduction axis) tile fits.
_MATMUL_VMEM_BUDGET = min(_VMEM // 2, 48 << 20)

# Tile caps (review: 64 MiB VMEM on v7x is never close to binding at these
# sizes, so use the same large caps on all generations).
TM_CAP, TN_CAP, TK_CAP = 512, 1024, 512


def _pick_tile(dim, cap, align):
    """Largest `align`-multiple divisor of dim that is <= cap, else None."""
    t = (cap // align) * align
    while t >= align:
        if dim % t == 0:
            return t
        t -= align
    return None


def _rows_tiling(M):
    """(padded_M, row_tile). Rows padded (zeros) when no aligned divisor fits."""
    if M <= TM_CAP:
        Mp = M + ((-M) % 16)          # bf16 sublane packing is (16, 128)
        return Mp, Mp
    tm = _pick_tile(M, TM_CAP, 16)
    if tm is not None:
        return M, tm
    Mp = ((M + TM_CAP - 1) // TM_CAP) * TM_CAP
    return Mp, TM_CAP


def _cols_tiling(N, cap=TN_CAP):
    """(padded_N, col_tile). Lane dim stays 128-aligned or equal to full dim."""
    if N <= cap:
        return N, N
    tn = _pick_tile(N, cap, 128)
    if tn is not None:
        return N, tn
    Np = ((N + cap - 1) // cap) * cap
    return Np, cap


def _pad_rows(x, Mp):
    M = x.shape[0]
    return x if Mp == M else jnp.pad(x, ((0, Mp - M), (0, 0)))


def _pad_cols(x, Np):
    N = x.shape[1]
    return x if Np == N else jnp.pad(x, ((0, 0), (0, Np - N)))


# ----------------------------- activation helper ---------------------------- #

def _apply_act(y, activation):
    if activation == "gelu":
        # TODO(synk): HF BERT uses exact erf-GELU; tanh approximation used here.
        return 0.5 * y * (1.0 + jnp.tanh(
            0.7978845608028654 * (y + 0.044715 * y * y * y)))
    if activation == "tanh":
        return jnp.tanh(y)
    return y


# --------------------------- linear (+bias +act) ---------------------------- #

def _matmul_bias_act_fullk_kernel(x_ref, w_ref, b_ref, o_ref, *, activation):
    # Full-K tile: one MXU sweep, no accumulator scratch / revisits.
    y = jnp.dot(x_ref[...], w_ref[...],
                preferred_element_type=jnp.float32) + b_ref[...]
    o_ref[...] = _apply_act(y, activation).astype(o_ref.dtype)


def _matmul_bias_act_kernel(x_ref, w_ref, b_ref, o_ref, acc_ref, *, activation):
    # Fallback when K is too large for a single VMEM-resident sweep.
    @pl.when(pl.program_id(2) == 0)
    def _():
        acc_ref[...] = jnp.zeros_like(acc_ref)

    acc_ref[...] += jnp.dot(x_ref[...], w_ref[...],
                            preferred_element_type=jnp.float32)

    @pl.when(pl.program_id(2) == pl.num_programs(2) - 1)
    def _():
        y = acc_ref[...] + b_ref[...]
        o_ref[...] = _apply_act(y, activation).astype(o_ref.dtype)


def linear(x, w, b, activation=None, out_dtype=jnp.bfloat16):
    """Tiled x @ w + b with optional fused activation. x:(M,K) bf16, w:(K,N) bf16."""
    M, K = x.shape
    N = w.shape[1]
    Mp, tm = _rows_tiling(M)
    Np, tn = _cols_tiling(N)
    xp = _pad_rows(x, Mp)
    wp = _pad_cols(w, Np)
    bp = (jnp.pad(b, (0, Np - N)) if Np != N else b).reshape(1, Np)

    fullk_bytes = 4 * (tm * K + K * tn + tm * tn)      # bf16, double-buffered
    if fullk_bytes <= _MATMUL_VMEM_BUDGET:
        kernel = functools.partial(_matmul_bias_act_fullk_kernel,
                                   activation=activation)
        out = pl.pallas_call(
            kernel,
            out_shape=jax.ShapeDtypeStruct((Mp, Np), out_dtype),
            grid=(Mp // tm, Np // tn),
            in_specs=[
                pl.BlockSpec((tm, K), lambda i, j: (i, 0)),
                pl.BlockSpec((K, tn), lambda i, j: (0, j)),
                pl.BlockSpec((1, tn), lambda i, j: (0, j)),
            ],
            out_specs=pl.BlockSpec((tm, tn), lambda i, j: (i, j)),
            compiler_params=pltpu.CompilerParams(
                dimension_semantics=("parallel", "parallel"),
                vmem_limit_bytes=_VMEM_LIMIT),
        )(xp, wp, bp)
    else:
        tk = _pick_tile(K, TK_CAP, 128) or K
        kernel = functools.partial(_matmul_bias_act_kernel,
                                   activation=activation)
        out = pl.pallas_call(
            kernel,
            out_shape=jax.ShapeDtypeStruct((Mp, Np), out_dtype),
            grid=(Mp // tm, Np // tn, K // tk),
            in_specs=[
                pl.BlockSpec((tm, tk), lambda i, j, k: (i, k)),
                pl.BlockSpec((tk, tn), lambda i, j, k: (k, j)),
                pl.BlockSpec((1, tn), lambda i, j, k: (0, j)),
            ],
            out_specs=pl.BlockSpec((tm, tn), lambda i, j, k: (i, j)),
            scratch_shapes=[pltpu.VMEM((tm, tn), jnp.float32)],
            compiler_params=pltpu.CompilerParams(
                dimension_semantics=("parallel", "parallel", "arbitrary"),
                vmem_limit_bytes=_VMEM_LIMIT),
        )(xp, wp, bp)

    if Mp != M or Np != N:
        out = out[:M, :N]
    return out


# -------------------- linear + residual + LayerNorm fused ------------------- #

def _matmul_res_ln_fullk_kernel(x_ref, w_ref, b_ref, r_ref, g_ref, bt_ref, o_ref):
    y = (jnp.dot(x_ref[...], w_ref[...], preferred_element_type=jnp.float32)
         + b_ref[...] + r_ref[...].astype(jnp.float32))
    mu = jnp.mean(y, axis=-1, keepdims=True)
    var = jnp.mean(jnp.square(y - mu), axis=-1, keepdims=True)
    o_ref[...] = ((y - mu) * jax.lax.rsqrt(var + 1e-12) * g_ref[...]
                  + bt_ref[...]).astype(o_ref.dtype)


def _matmul_res_ln_kernel(x_ref, w_ref, b_ref, r_ref, g_ref, bt_ref,
                          o_ref, acc_ref):
    @pl.when(pl.program_id(1) == 0)
    def _():
        acc_ref[...] = jnp.zeros_like(acc_ref)

    acc_ref[...] += jnp.dot(x_ref[...], w_ref[...],
                            preferred_element_type=jnp.float32)

    @pl.when(pl.program_id(1) == pl.num_programs(1) - 1)
    def _():
        y = acc_ref[...] + b_ref[...] + r_ref[...].astype(jnp.float32)
        mu = jnp.mean(y, axis=-1, keepdims=True)
        var = jnp.mean(jnp.square(y - mu), axis=-1, keepdims=True)
        o_ref[...] = ((y - mu) * jax.lax.rsqrt(var + 1e-12) * g_ref[...]
                      + bt_ref[...]).astype(o_ref.dtype)


def linear_res_ln(x, w, b, resid, gamma, beta, out_dtype=jnp.bfloat16):
    """Tiled LN(resid + x@w + b). N (=hidden) kept whole so LN sees full rows."""
    M, K = x.shape
    N = w.shape[1]
    Mp, tm = _rows_tiling(M)
    xp = _pad_rows(x, Mp)
    rp = _pad_rows(resid, Mp)
    b2 = b.reshape(1, N)
    g2 = gamma.reshape(1, N)
    bt2 = beta.reshape(1, N)

    fullk_bytes = 4 * (tm * K + K * N + 2 * tm * N)
    if fullk_bytes <= _MATMUL_VMEM_BUDGET:
        out = pl.pallas_call(
            _matmul_res_ln_fullk_kernel,
            out_shape=jax.ShapeDtypeStruct((Mp, N), out_dtype),
            grid=(Mp // tm,),
            in_specs=[
                pl.BlockSpec((tm, K), lambda i: (i, 0)),
                pl.BlockSpec((K, N), lambda i: (0, 0)),
                pl.BlockSpec((1, N), lambda i: (0, 0)),
                pl.BlockSpec((tm, N), lambda i: (i, 0)),
                pl.BlockSpec((1, N), lambda i: (0, 0)),
                pl.BlockSpec((1, N), lambda i: (0, 0)),
            ],
            out_specs=pl.BlockSpec((tm, N), lambda i: (i, 0)),
            compiler_params=pltpu.CompilerParams(
                dimension_semantics=("parallel",),
                vmem_limit_bytes=_VMEM_LIMIT),
        )(xp, w, b2, rp, g2, bt2)
    else:
        tk = _pick_tile(K, TK_CAP, 128) or K
        out = pl.pallas_call(
            _matmul_res_ln_kernel,
            out_shape=jax.ShapeDtypeStruct((Mp, N), out_dtype),
            grid=(Mp // tm, K // tk),
            in_specs=[
                pl.BlockSpec((tm, tk), lambda i, k: (i, k)),
                pl.BlockSpec((tk, N), lambda i, k: (k, 0)),
                pl.BlockSpec((1, N), lambda i, k: (0, 0)),
                pl.BlockSpec((tm, N), lambda i, k: (i, 0)),
                pl.BlockSpec((1, N), lambda i, k: (0, 0)),
                pl.BlockSpec((1, N), lambda i, k: (0, 0)),
            ],
            out_specs=pl.BlockSpec((tm, N), lambda i, k: (i, 0)),
            scratch_shapes=[pltpu.VMEM((tm, N), jnp.float32)],
            compiler_params=pltpu.CompilerParams(
                dimension_semantics=("parallel", "arbitrary"),
                vmem_limit_bytes=_VMEM_LIMIT),
        )(xp, w, b2, rp, g2, bt2)

    return out if Mp == M else out[:M]


# ------------------ embedding sum + LayerNorm fused kernel ------------------ #

def _embed_ln_kernel(w_ref, pos_ref, typ_ref, g_ref, b_ref, o_ref):
    # x = word_emb + pos_emb + type_emb, then LayerNorm; summed f32 tensor
    # never leaves VMEM (review: avoid the HBM round trip of the sum).
    x = (w_ref[0].astype(jnp.float32)
         + pos_ref[...].astype(jnp.float32)
         + typ_ref[...].astype(jnp.float32))
    mu = jnp.mean(x, axis=-1, keepdims=True)
    var = jnp.mean(jnp.square(x - mu), axis=-1, keepdims=True)
    o_ref[0] = ((x - mu) * jax.lax.rsqrt(var + 1e-12) * g_ref[...]
                + b_ref[...]).astype(o_ref.dtype)


def embed_layernorm(word_emb, pos_emb, type_row, gamma, beta,
                    out_dtype=jnp.bfloat16):
    """word_emb: (B,S,H) f32 gathered rows; pos_emb: (S,H); type_row: (1,H)."""
    B, S, H = word_emb.shape
    return pl.pallas_call(
        _embed_ln_kernel,
        out_shape=jax.ShapeDtypeStruct((B, S, H), out_dtype),
        grid=(B,),
        in_specs=[
            pl.BlockSpec((1, S, H), lambda b: (b, 0, 0)),
            pl.BlockSpec((S, H), lambda b: (0, 0)),
            pl.BlockSpec((1, H), lambda b: (0, 0)),
            pl.BlockSpec((1, H), lambda b: (0, 0)),
            pl.BlockSpec((1, H), lambda b: (0, 0)),
        ],
        out_specs=pl.BlockSpec((1, S, H), lambda b: (b, 0, 0)),
        compiler_params=pltpu.CompilerParams(
            dimension_semantics=("parallel",),
            vmem_limit_bytes=_VMEM_LIMIT),
    )(word_emb, pos_emb, type_row, gamma.reshape(1, H), beta.reshape(1, H))


# ------------------------------ attention ----------------------------------- #

def _sdp_head(q, k, v, m, out_dtype):
    """Single-head scaled-dot-product attention. q is pre-scaled by 1/sqrt(dh)."""
    s = jax.lax.dot_general(q, k, (((1,), (1,)), ((), ())),
                            preferred_element_type=jnp.float32) + m
    s = s - jnp.max(s, axis=-1, keepdims=True)
    e = jnp.exp(s)
    p = e / jnp.sum(e, axis=-1, keepdims=True)   # exact normalization (review)
    return jnp.dot(p.astype(v.dtype), v,
                   preferred_element_type=jnp.float32).astype(out_dtype)


def _attn_group_kernel(q_ref, k_ref, v_ref, m_ref, o_ref, *,
                       heads_per_group, head_dim):
    """One (batch, head-group) grid point.

    q/k/v_ref: (1, S, gw) 128-lane-aligned slabs selected by BlockSpec; each
    head's result is stored directly into its slice of the output block (no
    concatenate of all heads -> bounded live vregs).
    """
    # TODO(synk): for S >= 512 block K/V with an online (flash) softmax here.
    scale = 1.0 / float(head_dim) ** 0.5
    q_slab = q_ref[0] * scale                      # pre-scale Q on (S,gw) slab
    k_slab = k_ref[0]
    v_slab = v_ref[0]
    m = m_ref[0]                                   # (1, S) additive key mask
    for hh in range(heads_per_group):
        lo = hh * head_dim
        o_ref[0, :, lo:lo + head_dim] = _sdp_head(
            q_slab[:, lo:lo + head_dim], k_slab[:, lo:lo + head_dim],
            v_slab[:, lo:lo + head_dim], m, o_ref.dtype)


def _attn_full_kernel(qkv_ref, m_ref, o_ref, *, num_heads, head_dim, hidden):
    """Fallback (no 128-aligned head grouping possible): per-batch kernel."""
    scale = 1.0 / float(head_dim) ** 0.5
    m = m_ref[0]
    for h in range(num_heads):
        lo = h * head_dim
        q = qkv_ref[0, :, lo:lo + head_dim] * scale
        k = qkv_ref[0, :, hidden + lo:hidden + lo + head_dim]
        v = qkv_ref[0, :, 2 * hidden + lo:2 * hidden + lo + head_dim]
        o_ref[0, :, lo:lo + head_dim] = _sdp_head(q, k, v, m, o_ref.dtype)


def _attn_group_size(num_heads, head_dim):
    """Smallest divisor g of num_heads with 128-lane aligned group width."""
    for g in range(1, num_heads + 1):
        if num_heads % g == 0 and (g * head_dim) % 128 == 0:
            return g
    return None


def mha_attention(qkv, mask_bias, *, num_heads, head_dim):
    """qkv: (B, S, 3H) bf16 (lanes = [Q heads | K heads | V heads]);
    mask_bias: (B, 1, S) f32 additive (0 / -10000)."""
    B, S, threeH = qkv.shape
    H = num_heads * head_dim
    g = _attn_group_size(num_heads, head_dim)

    if g is not None:
        gw = g * head_dim                      # 128-lane-aligned group width
        ng = H // gw                           # groups per Q/K/V section
        kernel = functools.partial(_attn_group_kernel,
                                   heads_per_group=g, head_dim=head_dim)
        return pl.pallas_call(
            kernel,
            out_shape=jax.ShapeDtypeStruct((B, S, H), jnp.bfloat16),
            grid=(B, ng),
            in_specs=[
                pl.BlockSpec((1, S, gw), lambda b, gi: (b, 0, gi)),
                pl.BlockSpec((1, S, gw), lambda b, gi: (b, 0, ng + gi)),
                pl.BlockSpec((1, S, gw), lambda b, gi: (b, 0, 2 * ng + gi)),
                pl.BlockSpec((1, 1, S), lambda b, gi: (b, 0, 0)),
            ],
            out_specs=pl.BlockSpec((1, S, gw), lambda b, gi: (b, 0, gi)),
            compiler_params=pltpu.CompilerParams(
                dimension_semantics=("parallel", "parallel"),
                vmem_limit_bytes=_VMEM_LIMIT),
        )(qkv, qkv, qkv, mask_bias)

    kernel = functools.partial(_attn_full_kernel, num_heads=num_heads,
                               head_dim=head_dim, hidden=H)
    return pl.pallas_call(
        kernel,
        out_shape=jax.ShapeDtypeStruct((B, S, H), jnp.bfloat16),
        grid=(B,),
        in_specs=[
            pl.BlockSpec((1, S, threeH), lambda b: (b, 0, 0)),
            pl.BlockSpec((1, 1, S), lambda b: (b, 0, 0)),
        ],
        out_specs=pl.BlockSpec((1, S, H), lambda b: (b, 0, 0)),
        compiler_params=pltpu.CompilerParams(
            dimension_semantics=("parallel",),
            vmem_limit_bytes=_VMEM_LIMIT),
    )(qkv, mask_bias)


# ----------------------- pooler + additional_linear ------------------------- #

def _pooler_head_kernel(cls_ref, wp_ref, bp_ref, wa_ref, ba_ref, o_ref):
    # BERT pooler tanh + BertEncoder.additional_linear fused (dropout = eval id).
    pooled = jnp.tanh(
        jnp.dot(cls_ref[...], wp_ref[...], preferred_element_type=jnp.float32)
        + bp_ref[...])
    o_ref[...] = (jnp.dot(pooled.astype(wa_ref.dtype), wa_ref[...],
                          preferred_element_type=jnp.float32) + ba_ref[...])


def pooler_head(cls_tokens, wp, bp, wadd, badd):
    B, H = cls_tokens.shape
    O = wadd.shape[1]
    Bp, tb = _rows_tiling(B)
    x = _pad_rows(cls_tokens, Bp)
    out = pl.pallas_call(
        _pooler_head_kernel,
        out_shape=jax.ShapeDtypeStruct((Bp, O), jnp.float32),
        grid=(Bp // tb,),
        in_specs=[
            pl.BlockSpec((tb, H), lambda i: (i, 0)),
            pl.BlockSpec((H, H), lambda i: (0, 0)),
            pl.BlockSpec((1, H), lambda i: (0, 0)),
            pl.BlockSpec((H, O), lambda i: (0, 0)),
            pl.BlockSpec((1, O), lambda i: (0, 0)),
        ],
        out_specs=pl.BlockSpec((tb, O), lambda i: (i, 0)),
        compiler_params=pltpu.CompilerParams(
            dimension_semantics=("parallel",),
            vmem_limit_bytes=_VMEM_LIMIT),
    )(x, wp, bp.reshape(1, H), wadd, badd.reshape(1, O))
    return out if Bp == B else out[:B]


# -------------------------- in-batch score matmul ---------------------------- #

def _score_kernel(a_ref, b_ref, o_ref):
    # a @ b^T; kept in f32 to match the reference scoring precision.
    o_ref[...] = jax.lax.dot_general(
        a_ref[...], b_ref[...], (((1,), (1,)), ((), ())),
        preferred_element_type=jnp.float32)


def score_matmul(a, b):
    """a: (M, D), b: (N, D) -> (M, N) = a @ b.T  (random-negatives scoring)."""
    M, D = a.shape
    N = b.shape[0]
    Mp, tm = _rows_tiling(M)
    Np, tn = _cols_tiling(N)
    ap = _pad_rows(a, Mp)
    bp = _pad_rows(b, Np)
    out = pl.pallas_call(
        _score_kernel,
        out_shape=jax.ShapeDtypeStruct((Mp, Np), jnp.float32),
        grid=(Mp // tm, Np // tn),
        in_specs=[
            pl.BlockSpec((tm, D), lambda i, j: (i, 0)),
            pl.BlockSpec((tn, D), lambda i, j: (j, 0)),
        ],
        out_specs=pl.BlockSpec((tm, tn), lambda i, j: (i, j)),
        compiler_params=pltpu.CompilerParams(
            dimension_semantics=("parallel", "parallel"),
            vmem_limit_bytes=_VMEM_LIMIT),
    )(ap, bp)
    return out[:M, :N]


# --------------------------- Synthetic BERT model --------------------------- #

def init_encoder_params(key, cfg):
    H, F = cfg["hidden"], cfg["ffn"]
    V, P, L, O = cfg["vocab"], cfg["max_pos"], cfg["num_layers"], cfg["out_dim"]
    n_keys = 3 + 4 * L + 2
    ks = iter(jax.random.split(key, n_keys))
    BF = jnp.bfloat16

    def nrm(shape, dtype=jnp.float32):
        return (0.02 * jax.random.normal(next(ks), shape,
                                         dtype=jnp.float32)).astype(dtype)

    params = {
        "word_emb": nrm((V, H)),
        "pos_emb": nrm((P, H)),
        "type_emb": nrm((2, H)),
        "emb_ln_g": jnp.ones((H,), jnp.float32),
        "emb_ln_b": jnp.zeros((H,), jnp.float32),
        "layers": [],
    }
    for _ in range(L):
        params["layers"].append({
            # Wqkv lane layout: [Q heads | K heads | V heads] (heads contiguous)
            "Wqkv": nrm((H, 3 * H), BF), "bqkv": jnp.zeros((3 * H,), jnp.float32),
            "Wo": nrm((H, H), BF), "bo": jnp.zeros((H,), jnp.float32),
            "ln1_g": jnp.ones((H,), jnp.float32), "ln1_b": jnp.zeros((H,), jnp.float32),
            "W1": nrm((H, F), BF), "b1": jnp.zeros((F,), jnp.float32),
            "W2": nrm((F, H), BF), "b2": jnp.zeros((H,), jnp.float32),
            "ln2_g": jnp.ones((H,), jnp.float32), "ln2_b": jnp.zeros((H,), jnp.float32),
        })
    params["Wp"] = nrm((H, H), BF)                   # BERT pooler
    params["bp"] = jnp.zeros((H,), jnp.float32)
    params["Wadd"] = nrm((H, O), BF)                 # BertEncoder.additional_linear
    params["badd"] = jnp.zeros((O,), jnp.float32)
    return params


def bert_encode(p, cfg, token_ids, mask):
    B, S = token_ids.shape
    H, nh = cfg["hidden"], cfg["num_heads"]
    dh = H // nh

    # TODO(synk): embedding-table gather has no clean Pallas equivalent at these
    # sizes; the row gather stays in XLA, the sum + LayerNorm are fused below.
    word = jnp.take(p["word_emb"], token_ids, axis=0)             # (B, S, H) f32
    # segment_ids = token_ids * 0 in to_bert_input -> always type row 0.
    h2 = embed_layernorm(word, p["pos_emb"][:S], p["type_emb"][0:1],
                         p["emb_ln_g"], p["emb_ln_b"])            # (B, S, H) bf16
    h2 = h2.reshape(B * S, H)

    # Additive attention mask over key positions, shared by all heads: (B, 1, S).
    mask_bias = ((1.0 - mask.astype(jnp.float32)) * -10000.0)[:, None, :]

    for lyr in p["layers"]:
        # Self-attention: fused QKV projection, grouped-head MHA, fused Wo+res+LN.
        qkv = linear(h2, lyr["Wqkv"], lyr["bqkv"])                # (B*S, 3H) bf16
        ctx = mha_attention(qkv.reshape(B, S, 3 * H), mask_bias,
                            num_heads=nh, head_dim=dh)            # (B, S, H) bf16
        h2 = linear_res_ln(ctx.reshape(B * S, H), lyr["Wo"], lyr["bo"],
                           h2, lyr["ln1_g"], lyr["ln1_b"])

        # Feed-forward: fused bias+GELU, then fused W2+residual+LN.
        ff = linear(h2, lyr["W1"], lyr["b1"], activation="gelu")  # (B*S, F) bf16
        h2 = linear_res_ln(ff, lyr["W2"], lyr["b2"],
                           h2, lyr["ln2_g"], lyr["ln2_b"])

    # [CLS] rows via a cheap strided XLA slice, then fused pooler + add_linear.
    cls = h2.reshape(B, S, H)[:, 0, :]                            # (B, H) bf16
    return pooler_head(cls, p["Wp"], p["bp"], p["Wadd"], p["badd"])  # (B, O) f32


def biencoder_forward(ctxt_params, cand_params, cfg, context_input, cand_input):
    NULL_IDX = 0
    # to_bert_input
    mask_c = (context_input != NULL_IDX).astype(jnp.int32)
    mask_k = (cand_input != NULL_IDX).astype(jnp.int32)

    emb_ctxt = bert_encode(ctxt_params, cfg, context_input, mask_c)
    emb_cand = bert_encode(cand_params, cfg, cand_input, mask_k)

    # random_negs path (label_input is None): in-batch scoring matrix.
    return score_matmul(emb_ctxt, emb_cand)                       # (B_ctxt, B_cand)


# ---------------------------------- main ------------------------------------ #

if __name__ == "__main__":
    # hidden=128 / head_dim=64 so the 128-lane-aligned head-group path is used.
    cfg = dict(vocab=64, hidden=128, num_heads=2, ffn=256, max_pos=16,
               num_layers=2, out_dim=128)

    key = jax.random.PRNGKey(0)
    k1, k2, k3, k4 = jax.random.split(key, 4)
    ctxt_params = init_encoder_params(k1, cfg)   # separate ctxt BERT
    cand_params = init_encoder_params(k2, cfg)   # separate cand BERT

    B, S = 2, 8
    context_input = jax.random.randint(k3, (B, S), 1, cfg["vocab"], dtype=jnp.int32)
    cand_input = jax.random.randint(k4, (B, S), 1, cfg["vocab"], dtype=jnp.int32)
    # Insert padding (NULL_IDX=0) so the attention mask is exercised.
    context_input = context_input.at[0, -2:].set(0)
    cand_input = cand_input.at[1, -3:].set(0)

    scores = biencoder_forward(ctxt_params, cand_params, cfg,
                               context_input, cand_input)
    jax.block_until_ready(scores)
    assert scores.shape == (B, B) and scores.dtype == jnp.float32
    print("KERNEL_OK")
</pallas_src>

<mosaic_0001>
module attributes {stable_mosaic.version = 11 : i64} {
  func.func @_embed_ln_kernel(%arg0: i32, %arg1: memref<1x8x128xf32, #tpu.memory_space<vmem>>, %arg2: memref<8x128xf32, #tpu.memory_space<vmem>>, %arg3: memref<1x128xf32, #tpu.memory_space<vmem>>, %arg4: memref<1x128xf32, #tpu.memory_space<vmem>>, %arg5: memref<1x128xf32, #tpu.memory_space<vmem>>, %arg6: memref<1x8x128xbf16, #tpu.memory_space<vmem>>) attributes {dimension_semantics = [#tpu.dimension_semantics<parallel>], iteration_bounds = array<i64: 2>, scalar_prefetch = 0 : i64, scratch_operands = 0 : i64, tpu.core_type = #tpu.core_type<tc>, window_params = [{transform_indices = @transform_0, window_bounds = array<i64: 1, 8, 128>}, {pipeline_mode = #tpu.pipeline_mode<synchronous>, transform_indices = @transform_1, window_bounds = array<i64: 8, 128>}, {pipeline_mode = #tpu.pipeline_mode<synchronous>, transform_indices = @transform_2, window_bounds = array<i64: 1, 128>}, {pipeline_mode = #tpu.pipeline_mode<synchronous>, transform_indices = @transform_3, window_bounds = array<i64: 1, 128>}, {pipeline_mode = #tpu.pipeline_mode<synchronous>, transform_indices = @transform_4, window_bounds = array<i64: 1, 128>}, {transform_indices = @transform_5, window_bounds = array<i64: 1, 8, 128>}]} {
    %c0 = arith.constant 0 : index
    %c0_0 = arith.constant 0 : index
    %c0_1 = arith.constant 0 : index
    %0 = vector.load %arg1[%c0, %c0_0, %c0_1] : memref<1x8x128xf32, #tpu.memory_space<vmem>>, vector<1x8x128xf32>
    %1 = vector.shape_cast %0 : vector<1x8x128xf32> to vector<8x128xf32>
    %c0_2 = arith.constant 0 : index
    %c0_3 = arith.constant 0 : index
    %2 = vector.load %arg2[%c0_2, %c0_3] : memref<8x128xf32, #tpu.memory_space<vmem>>, vector<8x128xf32>
    %3 = arith.addf %1, %2 : vector<8x128xf32>
    %c0_4 = arith.constant 0 : index
    %c0_5 = arith.constant 0 : index
    %4 = vector.load %arg3[%c0_4, %c0_5] : memref<1x128xf32, #tpu.memory_space<vmem>>, vector<1x128xf32>
    %5 = vector.broadcast %4 : vector<1x128xf32> to vector<8x128xf32>
    %6 = arith.addf %3, %5 : vector<8x128xf32>
    %cst = arith.constant dense<0.000000e+00> : vector<8xf32>
    %7 = vector.multi_reduction <add>, %6, %cst [1] : vector<8x128xf32> to vector<8xf32>
    %8 = vector.shape_cast %7 : vector<8xf32> to vector<8x1xf32>
    %cst_6 = arith.constant 1.280000e+02 : f32
    %9 = vector.broadcast %cst_6 : f32 to vector<8x1xf32>
    %10 = arith.divf %8, %9 : vector<8x1xf32>
    %11 = vector.broadcast %10 : vector<8x1xf32> to vector<8x128xf32>
    %12 = arith.subf %6, %11 : vector<8x128xf32>
    %13 = arith.mulf %12, %12 : vector<8x128xf32>
    %cst_7 = arith.constant dense<0.000000e+00> : vector<8xf32>
    %14 = vector.multi_reduction <add>, %13, %cst_7 [1] : vector<8x128xf32> to vector<8xf32>
    %15 = vector.shape_cast %14 : vector<8xf32> to vector<8x1xf32>
    %cst_8 = arith.constant 1.280000e+02 : f32
    %16 = vector.broadcast %cst_8 : f32 to vector<8x1xf32>
    %17 = arith.divf %15, %16 : vector<8x1xf32>
    %18 = vector.broadcast %10 : vector<8x1xf32> to vector<8x128xf32>
    %19 = arith.subf %6, %18 : vector<8x128xf32>
    %cst_9 = arith.constant 9.99999996E-13 : f32
    %20 = vector.broadcast %cst_9 : f32 to vector<8x1xf32>
    %21 = arith.addf %17, %20 : vector<8x1xf32>
    %22 = math.rsqrt %21 : vector<8x1xf32>
    %23 = vector.broadcast %22 : vector<8x1xf32> to vector<8x128xf32>
    %24 = arith.mulf %19, %23 : vector<8x128xf32>
    %c0_10 = arith.constant 0 : index
    %c0_11 = arith.constant 0 : index
    %25 = vector.load %arg4[%c0_10, %c0_11] : memref<1x128xf32, #tpu.memory_space<vmem>>, vector<1x128xf32>
    %26 = vector.broadcast %25 : vector<1x128xf32> to vector<8x128xf32>
    %27 = arith.mulf %24, %26 : vector<8x128xf32>
    %c0_12 = arith.constant 0 : index
    %c0_13 = arith.constant 0 : index
    %28 = vector.load %arg5[%c0_12, %c0_13] : memref<1x128xf32, #tpu.memory_space<vmem>>, vector<1x128xf32>
    %29 = vector.broadcast %28 : vector<1x128xf32> to vector<8x128xf32>
    %30 = arith.addf %27, %29 : vector<8x128xf32>
    %31 = arith.truncf %30 : vector<8x128xf32> to vector<8x128xbf16>
    %c0_14 = arith.constant 0 : index
    %c0_15 = arith.constant 0 : index
    %c0_16 = arith.constant 0 : index
    %32 = vector.load %arg6[%c0_14, %c0_15, %c0_16] : memref<1x8x128xbf16, #tpu.memory_space<vmem>>, vector<1x8x128xbf16>
    %33 = vector.shape_cast %32 : vector<1x8x128xbf16> to vector<8x128xbf16>
    %34 = vector.shape_cast %31 : vector<8x128xbf16> to vector<1x8x128xbf16>
    tpu.vector_store %arg6[%c0_14, %c0_15, %c0_16], %34 {strides = array<i32>} : memref<1x8x128xbf16, #tpu.memory_space<vmem>>, vector<1x8x128xbf16>,
    return
  }
  func.func @transform_0(%arg0: i32) -> (i32, i32, i32) {
    %c0_i32 = arith.constant 0 : i32
    %c0_i32_0 = arith.constant 0 : i32
    %c0_i32_1 = arith.constant 0 : i32
    return %arg0, %c0_i32, %c0_i32_0 : i32, i32, i32
  }
  func.func @transform_1(%arg0: i32) -> (i32, i32) {
    %c0_i32 = arith.constant 0 : i32
    %c0_i32_0 = arith.constant 0 : i32
    %c0_i32_1 = arith.constant 0 : i32
    return %c0_i32, %c0_i32_0 : i32, i32
  }
  func.func @transform_2(%arg0: i32) -> (i32, i32) {
    %c0_i32 = arith.constant 0 : i32
    %c0_i32_0 = arith.constant 0 : i32
    %c0_i32_1 = arith.constant 0 : i32
    return %c0_i32, %c0_i32_0 : i32, i32
  }
  func.func @transform_3(%arg0: i32) -> (i32, i32) {
    %c0_i32 = arith.constant 0 : i32
    %c0_i32_0 = arith.constant 0 : i32
    %c0_i32_1 = arith.constant 0 : i32
    return %c0_i32, %c0_i32_0 : i32, i32
  }
  func.func @transform_4(%arg0: i32) -> (i32, i32) {
    %c0_i32 = arith.constant 0 : i32
    %c0_i32_0 = arith.constant 0 : i32
    %c0_i32_1 = arith.constant 0 : i32
    return %c0_i32, %c0_i32_0 : i32, i32
  }
  func.func @transform_5(%arg0: i32) -> (i32, i32, i32) {
    %c0_i32 = arith.constant 0 : i32
    %c0_i32_0 = arith.constant 0 : i32
    %c0_i32_1 = arith.constant 0 : i32
    return %arg0, %c0_i32, %c0_i32_0 : i32, i32, i32
  }
}

</mosaic_0001>

<llo_original>
// kernel: tpu_custom_call.1
$region0: #{tpu_custom_call.1}
  #allocation0 [shape = 'u32[]', space=smem, size = 0x4, offset = 0x4, fixed_abs, tag = 'smem constant byte address 0x4 - core index']
  #allocation1 [shape = 'u32[72,128]{1,0:T(1,128)}', space=vmem, size = 0x9000, scoped, tag = 'internal scratch']
  %s0 = inlined_call_operand.hbm [shape: f32[2,8,128], index: 0, kind: input, shape index: {}]
  %s1 = inlined_call_operand.hbm [shape: f32[8,128], index: 1, kind: input, shape index: {}]
  %s2 = inlined_call_operand.vmem [shape: f32[1,128], index: 2, kind: input, shape index: {}]
  %s3 = inlined_call_operand.vmem [shape: f32[1,128], index: 3, kind: input, shape index: {}]
  %s4 = inlined_call_operand.vmem [shape: f32[1,128], index: 4, kind: input, shape index: {}]
  %s5 = inlined_call_operand.hbm [shape: bf16[2,8,128], index: 5, kind: output, shape index: {}]
  %s6 = sld [smem:[#allocation0]]
  $region61: #{tpu_custom_call.1} parent=0
    _
  %s8 = ssub.s32 1, %s6
  %s9 = scalar_select 0, %s8, %s6
  $region1: #{tpu_custom_call.1} parent=0
    #allocation2 [shape = 'u8[8192]{0}', space=vmem, size = 0x2000, scoped, tag = 'input window, operand 0']
    #allocation3 [shape = 's32[2]{0}', space=sflag, size = 0x8, scoped, tag = 'scoped memory for tpu_custom_call.1']
    #allocation4 [shape = 's32[2]{0}', space=sflag, size = 0x8, scoped, tag = 'scoped memory for tpu_custom_call.1']
    #allocation5 [shape = 'u8[4096]{0}', space=vmem, size = 0x1000, scoped, tag = 'input window, operand 1, single buffered']
    #allocation6 [shape = 's32[1]{0}', space=sflag, size = 0x4, scoped, tag = 'scoped memory for tpu_custom_call.1']
    #allocation7 [shape = 'u8[4096]{0}', space=vmem, size = 0x1000, scoped, tag = 'output window, operand 0']
    %10 = vsyncpa [#allocation3], 0
    %s11 = scalar_lea.sflag [#allocation3], 1
    %12 = vsyncpa %s11, 0
    %13 = vsyncpa [#allocation6], 0
    %14 = vsyncpa [#allocation4], 0
    %s15 = scalar_lea.sflag [#allocation4], 1
    %16 = vsyncpa %s15, 0
    loop: start=0, step=1, limit=4
    $region2: #{tpu_custom_call.1} parent=1 // loop_pre_header
      _
    $region3: #{tpu_custom_call.1} parent=1 // loop_header
      %s18 = sphi 0, %s22
      %p19 = scmp.ge.s32.totalorder %s18, 4
      %s28 = sphi 0, %s30
      %s31 = sphi 0, %s28
      %s32 = sphi 0, %s31
      %s48 = sphi 0, %s32
      %s52 = sphi 0, %s52
      %s54 = sphi 0, %s52
      %s55 = sphi 0, %s54
      %s69 = sphi 0, %s55
      %s73 = sphi 0, %s73
      %s75 = sphi 0, %s73
      %s76 = sphi 0, %s75
      %s90 = sphi 0, %s76
      %s94 = sphi 0, %s94
      %s96 = sphi 0, %s94
      %s97 = sphi 0, %s96
      %s111 = sphi 0, %s97
      %s115 = sphi 0, %s115
      %s117 = sphi 0, %s115
      %s118 = sphi 0, %s117
      %s132 = sphi 0, %s118
      %s138 = sphi 0, %s140
      %s141 = sphi 0, %s138
      %s142 = sphi 0, %s141
      %s158 = sphi 0, %s142
    $region4: #{tpu_custom_call.1} parent=1 // loop_header_branch
      %21 = sbr.rel (%p19) target = $region8
    $region5: #{tpu_custom_call.1} parent=1 // loop_body
      %s23 = ssub.s32 %s18, 1
      %s24 = ssub.s32 %s18, 2
      %s25 = sadd.s32 %s18, 1
      %s26 = ssub.s32 %s18, %s25
      %p27 = scmp.eq.s32.totalorder %s26, 0
      %s29 = sadd.s32 %s28, 1
      %s30 = scalar_select %p27, %s28, %s29
      %p33 = pneg %p27
      %p34 = scmp.eq.s32.totalorder %s18, 1
      %p35 = por %p33, %p34
      %p36 = scmp.ne.s32.totalorder %s28, %s31
      %p37 = scmp.eq.s32.totalorder %s18, 0
      %p38 = por %p36, %p37
      %p39 = scmp.ne.s32.totalorder %s28, %s31
      %p40 = scmp.eq.s32.totalorder %s23, 1
      %p41 = por %p39, %p40
      %p42 = scmp.ne.s32.totalorder %s31, %s32
      %p43 = scmp.eq.s32.totalorder %s23, 0
      %p44 = por %p42, %p43
      %p45 = scmp.ne.s32.totalorder %s31, %s32
      %p46 = scmp.eq.s32.totalorder %s24, 1
      %p47 = por %p45, %p46
      %p49 = scmp.ne.s32.totalorder %s32, %s48
      %p50 = scmp.eq.s32.totalorder %s24, 0
      %p51 = por %p49, %p50
      %s53 = sadd.s32 %s52, 1
      %p56 = scmp.eq.s32.totalorder %s18, 1
      %p57 = scmp.ne.s32.totalorder %s52, %s54
      %p58 = scmp.eq.s32.totalorder %s18, 0
      %p59 = por %p57, %p58
      %p60 = scmp.ne.s32.totalorder %s52, %s54
      %p61 = scmp.eq.s32.totalorder %s23, 1
      %p62 = por %p60, %p61
      %p63 = scmp.ne.s32.totalorder %s54, %s55
      %p64 = scmp.eq.s32.totalorder %s23, 0
      %p65 = por %p63, %p64
      %p66 = scmp.ne.s32.totalorder %s54, %s55
      %p67 = scmp.eq.s32.totalorder %s24, 1
      %p68 = por %p66, %p67
      %p70 = scmp.ne.s32.totalorder %s55, %s69
      %p71 = scmp.eq.s32.totalorder %s24, 0
      %p72 = por %p70, %p71
      %s74 = sadd.s32 %s73, 1
      %p77 = scmp.eq.s32.totalorder %s18, 1
      %p78 = scmp.ne.s32.totalorder %s73, %s75
      %p79 = scmp.eq.s32.totalorder %s18, 0
      %p80 = por %p78, %p79
      %p81 = scmp.ne.s32.totalorder %s73, %s75
      %p82 = scmp.eq.s32.totalorder %s23, 1
      %p83 = por %p81, %p82
      %p84 = scmp.ne.s32.totalorder %s75, %s76
      %p85 = scmp.eq.s32.totalorder %s23, 0
      %p86 = por %p84, %p85
      %p87 = scmp.ne.s32.totalorder %s75, %s76
      %p88 = scmp.eq.s32.totalorder %s24, 1
      %p89 = por %p87, %p88
      %p91 = scmp.ne.s32.totalorder %s76, %s90
      %p92 = scmp.eq.s32.totalorder %s24, 0
      %p93 = por %p91, %p92
      %s95 = sadd.s32 %s94, 1
      %p98 = scmp.eq.s32.totalorder %s18, 1
      %p99 = scmp.ne.s32.totalorder %s94, %s96
      %p100 = scmp.eq.s32.totalorder %s18, 0
      %p101 = por %p99, %p100
      %p102 = scmp.ne.s32.totalorder %s94, %s96
      %p103 = scmp.eq.s32.totalorder %s23, 1
      %p104 = por %p102, %p103
      %p105 = scmp.ne.s32.totalorder %s96, %s97
      %p106 = scmp.eq.s32.totalorder %s23, 0
      %p107 = por %p105, %p106
      %p108 = scmp.ne.s32.totalorder %s96, %s97
      %p109 = scmp.eq.s32.totalorder %s24, 1
      %p110 = por %p108, %p109
      %p112 = scmp.ne.s32.totalorder %s97, %s111
      %p113 = scmp.eq.s32.totalorder %s24, 0
      %p114 = por %p112, %p113
      %s116 = sadd.s32 %s115, 1
      %p119 = scmp.eq.s32.totalorder %s18, 1
      %p120 = scmp.ne.s32.totalorder %s115, %s117
      %p121 = scmp.eq.s32.totalorder %s18, 0
      %p122 = por %p120, %p121
      %p123 = scmp.ne.s32.totalorder %s115, %s117
      %p124 = scmp.eq.s32.totalorder %s23, 1
      %p125 = por %p123, %p124
      %p126 = scmp.ne.s32.totalorder %s117, %s118
      %p127 = scmp.eq.s32.totalorder %s23, 0
      %p128 = por %p126, %p127
      %p129 = scmp.ne.s32.totalorder %s117, %s118
      %p130 = scmp.eq.s32.totalorder %s24, 1
      %p131 = por %p129, %p130
      %p133 = scmp.ne.s32.totalorder %s118, %s132
      %p134 = scmp.eq.s32.totalorder %s24, 0
      %p135 = por %p133, %p134
      %s136 = ssub.s32 %s18, %s25
      %p137 = scmp.eq.s32.totalorder %s136, 0
      %s139 = sadd.s32 %s138, 1
      %s140 = scalar_select %p137, %s138, %s139
      %p143 = pneg %p137
      %p144 = scmp.eq.s32.totalorder %s18, 1
      %p145 = por %p143, %p144
      %p146 = scmp.ne.s32.totalorder %s138, %s141
      %p147 = scmp.eq.s32.totalorder %s18, 0
      %p148 = por %p146, %p147
      %p149 = scmp.ne.s32.totalorder %s138, %s141
      %p150 = scmp.eq.s32.totalorder %s23, 1
      %p151 = por %p149, %p150
      %p152 = scmp.ne.s32.totalorder %s141, %s142
      %p153 = scmp.eq.s32.totalorder %s23, 0
      %p154 = por %p152, %p153
      %p155 = scmp.ne.s32.totalorder %s141, %s142
      %p156 = scmp.eq.s32.totalorder %s24, 1
      %p157 = por %p155, %p156
      %p159 = scmp.ne.s32.totalorder %s142, %s158
      %p160 = scmp.eq.s32.totalorder %s24, 0
      %p161 = por %p159, %p160
      %p162 = scmp.le.s32.totalorder 1, %s18
      %p163 = scmp.lt.s32.totalorder %s18, 3
      %p164 = pnand %p162, %p163
      %p165 = pneg %p164
      // Predicated region
      $region9: #{tpu_custom_call.1} parent=5 // pred_check
        _
      $region10: #{tpu_custom_call.1} parent=5 // pred_check_branch
        %167 = sbr.rel (%p164) target = $region12
      $region11: #{tpu_custom_call.1} parent=5 // pred_region
        %s168 = ssub.s32 %s18, 1
        // Predicated region
        $region13: #{tpu_custom_call.1} parent=11 // pred_check
          %p169 = pneg %p65
        $region14: #{tpu_custom_call.1} parent=11 // pred_check_branch
          %171 = sbr.rel (%p169) target = $region16
        $region15: #{tpu_custom_call.1} parent=11 // pred_region
          %173 = vsyncadd [#allocation6], 0
          %s175 = sshll.u32 %s1, 4
          %s176 = int_to_ptr.hbm [resolvable:$true] %s175
          %s177 = sshll.u32 [#allocation5], 4
          %s178 = int_to_ptr.vmem [resolvable:$true] %s177
          %180 = dma.hbm_to_vmem [thread:$0]  %s176, 128, %s178, [#allocation6]
        $region16: #{tpu_custom_call.1} parent=11 // pred_fallthru
          _
        // Predicated region
        $region17: #{tpu_custom_call.1} parent=11 // pred_check
          %p181 = pneg %p86
        $region18: #{tpu_custom_call.1} parent=11 // pred_check_branch
          %183 = sbr.rel (%p181) target = $region20
        $region19: #{tpu_custom_call.1} parent=11 // pred_region
          _
        $region20: #{tpu_custom_call.1} parent=11 // pred_fallthru
          _
        // Predicated region
        $region21: #{tpu_custom_call.1} parent=11 // pred_check
          %p184 = pneg %p107
        $region22: #{tpu_custom_call.1} parent=11 // pred_check_branch
          %186 = sbr.rel (%p184) target = $region24
        $region23: #{tpu_custom_call.1} parent=11 // pred_region
          _
        $region24: #{tpu_custom_call.1} parent=11 // pred_fallthru
          _
        // Predicated region
        $region25: #{tpu_custom_call.1} parent=11 // pred_check
          %p187 = pneg %p128
        $region26: #{tpu_custom_call.1} parent=11 // pred_check_branch
          %189 = sbr.rel (%p187) target = $region28
        $region27: #{tpu_custom_call.1} parent=11 // pred_region
          _
        $region28: #{tpu_custom_call.1} parent=11 // pred_fallthru
          _
      $region12: #{tpu_custom_call.1} parent=5 // pred_fallthru
        _
      %p190 = scmp.lt.s32.totalorder %s18, 2
      // Predicated region
      $region29: #{tpu_custom_call.1} parent=5 // pred_check
        %p191 = pneg %p190
      $region30: #{tpu_custom_call.1} parent=5 // pred_check_branch
        %193 = sbr.rel (%p191) target = $region32
      $region31: #{tpu_custom_call.1} parent=5 // pred_region
        // Predicated region
        $region33: #{tpu_custom_call.1} parent=31 // pred_check
          %p194 = pneg %p38
        $region34: #{tpu_custom_call.1} parent=31 // pred_check_branch
          %196 = sbr.rel (%p194) target = $region36
        $region35: #{tpu_custom_call.1} parent=31 // pred_region
          %s197 = sand.u32 %s28, 1
          %s198 = scalar_lea.sflag [#allocation3], %s197
          %s199 = sand.u32 %s28, 1
          %s200 = smul.addr %s199, 8
          %s201 = scalar_lea.vmem [#allocation2], %s200
          %203 = vsyncadd %s198, 0
          %s204 = smul.addr %s18, 8
          %s205 = scalar_lea.hbm %s0, %s204
          %s207 = sshll.u32 %s205, 4
          %s208 = int_to_ptr.hbm [resolvable:$true] %s207
          %s209 = sshll.u32 %s201, 4
          %s210 = int_to_ptr.vmem [resolvable:$true] %s209
          %212 = dma.hbm_to_vmem [thread:$0]  %s208, 128, %s210, %s198
        $region36: #{tpu_custom_call.1} parent=31 // pred_fallthru
          _
      $region32: #{tpu_custom_call.1} parent=5 // pred_fallthru
        _
      %p213 = scmp.le.s32.totalorder 1, %s18
      %p214 = scmp.lt.s32.totalorder %s18, 3
      %p215 = pnand %p213, %p214
      %p216 = pneg %p215
      // Predicated region
      $region37: #{tpu_custom_call.1} parent=5 // pred_check
        _
      $region38: #{tpu_custom_call.1} parent=5 // pred_check_branch
        %218 = sbr.rel (%p215) target = $region40
      $region39: #{tpu_custom_call.1} parent=5 // pred_region
        %s219 = ssub.s32 %s18, 1
        %s220 = sand.u32 %s31, 1
        %s221 = scalar_lea.sflag [#allocation3], %s220
        %s222 = sand.u32 %s31, 1
        %s223 = smul.addr %s222, 8
        %s224 = scalar_lea.vmem [#allocation2], %s223
        // Predicated region
        $region41: #{tpu_custom_call.1} parent=39 // pred_check
          %p225 = pneg %p44
        $region42: #{tpu_custom_call.1} parent=39 // pred_check_branch
          %227 = sbr.rel (%p225) target = $region44
        $region43: #{tpu_custom_call.1} parent=39 // pred_region
          %229 = dma.done %s221, 128
        $region44: #{tpu_custom_call.1} parent=39 // pred_fallthru
          _
        // Predicated region
        $region45: #{tpu_custom_call.1} parent=39 // pred_check
          %p230 = pneg %p65
        $region46: #{tpu_custom_call.1} parent=39 // pred_check_branch
          %232 = sbr.rel (%p230) target = $region48
        $region47: #{tpu_custom_call.1} parent=39 // pred_region
          %234 = dma.done [#allocation6], 128
        $region48: #{tpu_custom_call.1} parent=39 // pred_fallthru
          _
        %s235 = sand.u32 %s31, 1
        %s236 = scalar_lea.sflag [#allocation3], %s235
        %s237 = sand.u32 %s31, 1
        %s238 = smul.addr %s237, 8
        %s239 = scalar_lea.vmem [#allocation2], %s238
        %p240 = pneg %p44
        %p241 = pneg %p41
        %p242 = pneg %p65
        %p243 = pneg %p62
        %p244 = pneg %p86
        %p245 = pneg %p83
        %p246 = pneg %p107
        %p247 = pneg %p104
        %p248 = pneg %p128
        %p249 = pneg %p125
        %p250 = pneg %p154
        %p251 = pneg %p151
        %s252 = sand.u32 %s141, 1
        %s253 = scalar_lea.sflag [#allocation4], %s252
        %s254 = sand.u32 %s141, 1
        %s255 = smul.addr %s254, 4
        %s256 = scalar_lea.vmem [#allocation7], %s255
        %v257 = vld [vmem:[%s224] sm:$0xff]
        %v258 = vld [vmem:[#allocation5] sm:$0xff]
        %v259 = vadd.f32 %v257, %v258
        %v260 = vld [vmem:[%s2] sm:$0x1]
        %v262 = vperm.slane %v260, 0
        %v264 = vadd.f32 %v259, %v262
        %265 = vadd.xlane.f32.xlu0 %v264
        %v266 = vpop.xlane.xlu0 %265
        %v267 = vrcp.pop 128.0
        %v268 = vmul.f32 128.0, %v267
        %v269 = vsub.f32 1.0, %v268
        %v270 = vmul.f32 %v267, %v269
        %v271 = vadd.f32 %v267, %v270
        %vm272 = vweird.f32 %v267
        %v273 = vsel %vm272, %v267, %v271
        %v274 = vmul.f32 %v266, %v273
        %v275 = vsub.f32 %v264, %v274
        %v276 = vmul.f32 %v275, %v275
        %277 = vadd.xlane.f32.xlu0 %v276
        %v278 = vpop.xlane.xlu0 %277
        %v279 = vmul.f32 %v278, %v273
        %v280 = vadd.f32 %v279, 1e-12
        %v281 = vrsqrt.pop %v280
        %v282 = vmul.f32 %v281, %v280
        %v283 = vmul.f32 %v282, %v281
        %v284 = vmul.f32 0.5, %v283
        %v285 = vsub.f32 1.5, %v284
        %v286 = vmul.f32 %v281, %v285
        %vm287 = vweird.f32 %v280
        %vm288 = vweird.f32 %v281
        %vm289 = vmor %vm287, %vm288
        %v290 = vsel %vm289, %v281, %v286
        %v291 = vmul.f32 %v275, %v290
        %v292 = vld [vmem:[%s3] sm:$0x1]
        %v294 = vperm.slane %v292, 0
        %v296 = vmul.f32 %v291, %v294
        %v297 = vld [vmem:[%s4] sm:$0x1]
        %v299 = vperm.slane %v297, 0
        %v301 = vadd.f32 %v296, %v299
        %v302 = vpack.c.bf16 %v301, %v301
        %303 = vst [vmem:[%s256] sm:$0xf] %v302
        %s304 = sand.u32 %s141, 1
        %s305 = scalar_lea.sflag [#allocation4], %s304
        %s306 = sand.u32 %s141, 1
        %s307 = smul.addr %s306, 4
        %s308 = scalar_lea.vmem [#allocation7], %s307
        // Predicated region
        $region49: #{tpu_custom_call.1} parent=39 // pred_check
          %p309 = pneg %p151
        $region50: #{tpu_custom_call.1} parent=39 // pred_check_branch
          %311 = sbr.rel (%p309) target = $region52
        $region51: #{tpu_custom_call.1} parent=39 // pred_region
          %313 = vsyncadd %s305, 0
          %s314 = smul.addr %s23, 4
          %s315 = scalar_lea.hbm %s5, %s314
          %s317 = sshll.u32 %s308, 4
          %s318 = int_to_ptr.vmem [resolvable:$true] %s317
          %s319 = sshll.u32 %s315, 4
          %s320 = int_to_ptr.hbm [resolvable:$true] %s319
          %322 = dma.vmem_to_hbm [thread:$0]  %s318, 64, %s320, %s305
        $region52: #{tpu_custom_call.1} parent=39 // pred_fallthru
          _
      $region40: #{tpu_custom_call.1} parent=5 // pred_fallthru
        _
      %p323 = scmp.le.s32.totalorder 2, %s18
      // Predicated region
      $region53: #{tpu_custom_call.1} parent=5 // pred_check
        %p324 = pneg %p323
      $region54: #{tpu_custom_call.1} parent=5 // pred_check_branch
        %326 = sbr.rel (%p324) target = $region56
      $region55: #{tpu_custom_call.1} parent=5 // pred_region
        %s327 = ssub.s32 %s18, 2
        // Predicated region
        $region57: #{tpu_custom_call.1} parent=55 // pred_check
          %p328 = pneg %p157
        $region58: #{tpu_custom_call.1} parent=55 // pred_check_branch
          %330 = sbr.rel (%p328) target = $region60
        $region59: #{tpu_custom_call.1} parent=55 // pred_region
          %s331 = sand.u32 %s142, 1
          %s332 = scalar_lea.sflag [#allocation4], %s331
          %s333 = sand.u32 %s142, 1
          %s334 = smul.addr %s333, 4
          %s335 = scalar_lea.vmem [#allocation7], %s334
          %337 = dma.done %s332, 64
        $region60: #{tpu_custom_call.1} parent=55 // pred_fallthru
          _
      $region56: #{tpu_custom_call.1} parent=5 // pred_fallthru
        _
    $region6: #{tpu_custom_call.1} parent=1 // loop_footer
      %s22 = sadd.s32 1, %s18
    $region7: #{tpu_custom_call.1} parent=1 // loop_footer_branch
      %17 = sbr.rel target = $region3
    $region8: #{tpu_custom_call.1} parent=1 // loop_exit
      _
    %338 = vsyncpa [#allocation3], 1
    %s339 = scalar_lea.sflag [#allocation3], 1
    %340 = vsyncpa %s339, 1
    %341 = vsyncpa [#allocation6], 1
    %342 = vsyncpa [#allocation4], 1
    %s343 = scalar_lea.sflag [#allocation4], 1
    %344 = vsyncpa %s343, 1

</llo_original>
